<compile_context>
chip_gen: v6e
topology: v6e:2x2x1
jax: 0.10.0
libtpu: 0.0.40
codegen_flags: <defaults>
</compile_context>

<pallas_src>
import functools

import jax
import jax.numpy as jnp
from jax.experimental import pallas as pl
from jax.experimental.pallas import tpu as pltpu


def _round_up(x: int, m: int) -> int:
    return ((x + m - 1) // m) * m


def _sublane_multiple(dtype) -> int:
    itemsize = jnp.dtype(dtype).itemsize
    if itemsize >= 4:
        return 8
    if itemsize == 2:
        return 16
    return 32


def _vmem_capacity_bytes() -> int:
    try:
        cap = int(pltpu.get_tpu_info().vmem_capacity_bytes)
        if cap > 0:
            return cap
    except Exception:
        pass
    return 64 << 20  # conservative fallback: v7x per-TC physical VMEM


def mlp_kernel(x_ref, w1_ref, b1_ref, w2_ref, b2_ref, o_ref, acc_ref, *, approx_gelu):
    # grid = (M tiles, H chunks).  Axis 1 is the fc1-output / fc2-contraction axis.
    # x_ref: (TM, C)  w1_ref: (C, TH)  b1_ref: (1, TH) f32
    # w2_ref: (TH, O) b2_ref: (1, O) f32  o_ref: (TM, O)  acc_ref: (TM, O) f32
    k = pl.program_id(1)

    @pl.when(k == 0)
    def _init():
        acc_ref[...] = jnp.zeros_like(acc_ref)

    # fc1 chunk on the MXU: native-dtype operands, f32 accumulation.
    h = jnp.dot(x_ref[...], w1_ref[...], preferred_element_type=jnp.float32)
    h = h + b1_ref[...]  # f32 bias broadcast

    if approx_gelu:
        # tanh-approx GELU (EUP path; cheaper under a VALU-bound loop, different numerics).
        c = jnp.float32(0.7978845608028654)  # sqrt(2/pi)
        h = 0.5 * h * (1.0 + jnp.tanh(c * (h + 0.044715 * h * h * h)))
    else:
        # Exact GELU: matches torch.nn.GELU default.
        h = 0.5 * h * (1.0 + jax.lax.erf(h * jnp.float32(0.7071067811865476)))

    # Dropout with p=0.0 is the identity (eval semantics).
    # TODO(synk): training-mode dropout (p > 0) is not implemented.

    # fc2 partial product, accumulated across H chunks in the f32 VMEM scratch.
    acc_ref[...] += jnp.dot(h.astype(w2_ref.dtype), w2_ref[...],
                            preferred_element_type=jnp.float32)

    @pl.when(k == pl.num_programs(1) - 1)
    def _finalize():
        o_ref[...] = (acc_ref[...] + b2_ref[...]).astype(o_ref.dtype)


def mlp_pallas(x, w1, b1, w2, b2, *, tm=None, th=None, approx_gelu=False):
    """x: (B, N, C); w1: (C, H); b1: (H,); w2: (H, O); b2: (O,). Returns (B, N, O)."""
    B, N, C = x.shape
    H = w1.shape[1]
    O = w2.shape[1]
    M = B * N

    xb = jnp.dtype(x.dtype).itemsize
    wb = jnp.dtype(w1.dtype).itemsize
    sub = _sublane_multiple(x.dtype)

    cap = _vmem_capacity_bytes()
    budget = cap - (12 << 20)  # headroom for compiler scratch / semaphores

    # --- choose TH (H chunk size) ----------------------------------------------
    if th is None:
        resident_w = (C * H + H * O) * wb + (H + O) * 4
        if resident_w <= budget // 2 or H % 128 != 0:
            # Weights fit comfortably (or H is not lane-tileable): keep them resident.
            th = H
        else:
            align = 256 if H % 256 == 0 else 128  # MXU-friendly contraction chunks
            th = align
            for d in range(align, H + 1, align):
                if H % d == 0 and 2 * (C + O) * d * wb <= budget // 2:
                    th = d
    n_h = max(1, H // th)

    w_bufs = 1 if n_h == 1 else 2  # single-buffer fully-resident weights
    weight_bytes = w_bufs * (C * th + th * O) * wb + w_bufs * th * 4 + O * 4

    # --- choose TM (token tile) from the remaining VMEM budget ------------------
    if tm is None:
        cast_bytes = th * wb if jnp.dtype(w1.dtype) != jnp.dtype(jnp.float32) else 0
        row_bytes = 2 * C * xb + 2 * O * xb + O * 4 + th * 4 + cast_bytes
        tm_cap = max(sub, (budget - weight_bytes) // max(row_bytes, 1))
        tm_target = 2048 if xb <= 2 else 1024
        tm = min(tm_target, tm_cap)

    tm = max(sub, min(int(tm), _round_up(M, sub)))
    # v7x megacore: make sure the parallel M axis has >= 2 steps when possible.
    if tm >= M and M > sub:
        tm = _round_up((M + 1) // 2, sub)
    tm = max(sub, (tm // sub) * sub)

    # Avoid wrapper-side pad + slice HBM round trips: nudge TM to a divisor of M.
    if M % tm != 0 and M % sub == 0:
        for cand in range(tm, max(sub, tm // 2) - 1, -sub):
            if M % cand == 0:
                tm = cand
                break

    m_pad = _round_up(M, tm)
    grid = (m_pad // tm, n_h)

    x2d = x.reshape(M, C)
    if m_pad != M:
        x2d = jnp.pad(x2d, ((0, m_pad - M), (0, 0)))

    # Biases pre-cast to f32 once wrapper-side.
    b1f = b1.astype(jnp.float32).reshape(1, H)
    b2f = b2.astype(jnp.float32).reshape(1, O)

    # VMEM footprint estimate -> scoped limit (never above physical capacity).
    cast_bytes = tm * th * wb if jnp.dtype(w1.dtype) != jnp.dtype(jnp.float32) else 0
    est = (weight_bytes
           + 2 * tm * C * xb + 2 * tm * O * xb   # double-buffered x / out tiles
           + tm * O * 4                          # f32 accumulator scratch
           + tm * th * 4 + cast_bytes)           # f32 hidden temp (+ bf16 recast)
    vmem_limit = int(min(cap, max(est + (16 << 20), 32 << 20)))

    cost = pl.CostEstimate(
        flops=2 * M * (C * H + H * O),
        transcendentals=M * H,
        bytes_accessed=M * C * xb + M * O * xb + (C * H + H * O) * wb + (H + O) * 4,
    )

    def _run(single_buffer):
        res_single = single_buffer and n_h == 1

        def spec(shape, imap, single=False):
            if single:
                return pl.BlockSpec(shape, imap, pipeline_mode=pl.Buffered(1))
            return pl.BlockSpec(shape, imap)

        return pl.pallas_call(
            functools.partial(mlp_kernel, approx_gelu=approx_gelu),
            out_shape=jax.ShapeDtypeStruct((m_pad, O), x.dtype),
            grid=grid,
            in_specs=[
                spec((tm, C), lambda i, k: (i, 0)),                 # x: streams over M
                spec((C, th), lambda i, k: (0, k), res_single),     # w1 H-slice
                spec((1, th), lambda i, k: (0, k), res_single),     # b1 H-slice (f32)
                spec((th, O), lambda i, k: (k, 0), res_single),     # w2 H-slice
                spec((1, O), lambda i, k: (0, 0), single_buffer),   # b2 (f32), resident
            ],
            out_specs=pl.BlockSpec((tm, O), lambda i, k: (i, 0)),
            scratch_shapes=[pltpu.VMEM((tm, O), jnp.float32)],
            compiler_params=pltpu.CompilerParams(
                dimension_semantics=("parallel", "arbitrary"),
                vmem_limit_bytes=vmem_limit,
            ),
            cost_estimate=cost,
        )(x2d, w1, b1f, w2, b2f)

    try:
        out2d = _run(True)
    except Exception:
        # Fall back to default (double) buffering if Buffered(1) is unsupported.
        out2d = _run(False)

    if m_pad != M:
        out2d = out2d[:M]
    return out2d.reshape(B, N, O)


def init_params(key, in_features, hidden_features, out_features, dtype=jnp.float32):
    # Deterministic synthetic init mimicking nn.Linear's uniform(-1/sqrt(fan_in), 1/sqrt(fan_in))
    k1, k2, k3, k4 = jax.random.split(key, 4)
    lim1 = 1.0 / jnp.sqrt(in_features)
    lim2 = 1.0 / jnp.sqrt(hidden_features)
    w1 = jax.random.uniform(k1, (in_features, hidden_features), dtype, -lim1, lim1)
    b1 = jax.random.uniform(k2, (hidden_features,), dtype, -lim1, lim1)
    w2 = jax.random.uniform(k3, (hidden_features, out_features), dtype, -lim2, lim2)
    b2 = jax.random.uniform(k4, (out_features,), dtype, -lim2, lim2)
    return w1, b1, w2, b2


if __name__ == "__main__":
    key = jax.random.PRNGKey(0)
    kx, kp = jax.random.split(key)

    B, N, C = 2, 8, 4          # batch, tokens, in_features
    H = 32                     # hidden_features
    O = C                      # out_features defaults to in_features

    x = jax.random.normal(kx, (B, N, C), dtype=jnp.float32)
    w1, b1, w2, b2 = init_params(kp, C, H, O)

    out = mlp_pallas(x, w1, b1, w2, b2)
    out = jax.block_until_ready(out)

    # sanity check against pure-JAX reference (exact-erf GELU, matching torch.nn.GELU default)
    h_ref = jnp.dot(x, w1) + b1
    h_ref = 0.5 * h_ref * (1.0 + jax.lax.erf(h_ref / jnp.sqrt(2.0)))
    ref = jnp.dot(h_ref, w2) + b2
    assert out.shape == (B, N, O)
    assert jnp.allclose(out, ref, atol=1e-5, rtol=1e-5)

    print("KERNEL_OK")
</pallas_src>

<mosaic_0001>
module attributes {stable_mosaic.version = 11 : i64} {
  func.func @mlp_kernel(%arg0: i32, %arg1: i32, %arg2: memref<8x4xf32, #tpu.memory_space<vmem>>, %arg3: memref<4x32xf32, #tpu.memory_space<vmem>>, %arg4: memref<1x32xf32, #tpu.memory_space<vmem>>, %arg5: memref<32x4xf32, #tpu.memory_space<vmem>>, %arg6: memref<1x4xf32, #tpu.memory_space<vmem>>, %arg7: memref<8x4xf32, #tpu.memory_space<vmem>>, %arg8: memref<8x4xf32, #tpu.memory_space<vmem>>) attributes {dimension_semantics = [#tpu.dimension_semantics<parallel>, #tpu.dimension_semantics<arbitrary>], iteration_bounds = array<i64: 2, 1>, scalar_prefetch = 0 : i64, scratch_operands = 1 : i64, tpu.core_type = #tpu.core_type<tc>, window_params = [{transform_indices = @transform_0, window_bounds = array<i64: 8, 4>}, {pipeline_mode = #tpu.pipeline_mode<synchronous>, transform_indices = @transform_1, window_bounds = array<i64: 4, 32>}, {pipeline_mode = #tpu.pipeline_mode<synchronous>, transform_indices = @transform_2, window_bounds = array<i64: 1, 32>}, {pipeline_mode = #tpu.pipeline_mode<synchronous>, transform_indices = @transform_3, window_bounds = array<i64: 32, 4>}, {pipeline_mode = #tpu.pipeline_mode<synchronous>, transform_indices = @transform_4, window_bounds = array<i64: 1, 4>}, {transform_indices = @transform_5, window_bounds = array<i64: 8, 4>}]} {
    %c0_i32 = arith.constant 0 : i32
    %0 = arith.cmpi eq, %arg1, %c0_i32 : i32
    %1 = arith.extui %0 : i1 to i32
    %c0_i32_0 = arith.constant 0 : i32
    %2 = arith.cmpi ne, %1, %c0_i32_0 : i32
    scf.if %2 {
      %cst_18 = arith.constant 0.000000e+00 : f32
      %25 = vector.broadcast %cst_18 : f32 to vector<8x4xf32>
      %c0_19 = arith.constant 0 : index
      %c0_20 = arith.constant 0 : index
      %26 = vector.load %arg8[%c0_19, %c0_20] : memref<8x4xf32, #tpu.memory_space<vmem>>, vector<8x4xf32>
      tpu.vector_store %arg8[%c0_19, %c0_20], %25 {strides = array<i32>} : memref<8x4xf32, #tpu.memory_space<vmem>>, vector<8x4xf32>,
    } else {
    }
    %c0 = arith.constant 0 : index
    %c0_1 = arith.constant 0 : index
    %3 = vector.load %arg2[%c0, %c0_1] : memref<8x4xf32, #tpu.memory_space<vmem>>, vector<8x4xf32>
    %c0_2 = arith.constant 0 : index
    %c0_3 = arith.constant 0 : index
    %4 = vector.load %arg3[%c0_2, %c0_3] : memref<4x32xf32, #tpu.memory_space<vmem>>, vector<4x32xf32>
    %cst = arith.constant dense<0.000000e+00> : vector<8x32xf32>
    %5 = tpu.matmul %3, %4, %cst {dimension_numbers = #tpu.dot_dimension_numbers<[1], [0], [0], [1], [0, 0, 1, 1], [], []>} : vector<8x4xf32>, vector<4x32xf32>, vector<8x32xf32> -> vector<8x32xf32>
    %c0_4 = arith.constant 0 : index
    %c0_5 = arith.constant 0 : index
    %6 = vector.load %arg4[%c0_4, %c0_5] : memref<1x32xf32, #tpu.memory_space<vmem>>, vector<1x32xf32>
    %7 = vector.broadcast %6 : vector<1x32xf32> to vector<8x32xf32>
    %8 = arith.addf %5, %7 : vector<8x32xf32>
    %cst_6 = arith.constant 5.000000e-01 : f32
    %9 = vector.broadcast %cst_6 : f32 to vector<8x32xf32>
    %10 = arith.mulf %9, %8 : vector<8x32xf32>
    %cst_7 = arith.constant 0.707106769 : f32
    %11 = vector.broadcast %cst_7 : f32 to vector<8x32xf32>
    %12 = arith.mulf %8, %11 : vector<8x32xf32>
    %13 = math.erf %12 : vector<8x32xf32>
    %cst_8 = arith.constant 1.000000e+00 : f32
    %14 = vector.broadcast %cst_8 : f32 to vector<8x32xf32>
    %15 = arith.addf %14, %13 : vector<8x32xf32>
    %16 = arith.mulf %10, %15 : vector<8x32xf32>
    %c0_9 = arith.constant 0 : index
    %c0_10 = arith.constant 0 : index
    %17 = vector.load %arg8[%c0_9, %c0_10] : memref<8x4xf32, #tpu.memory_space<vmem>>, vector<8x4xf32>
    %c0_11 = arith.constant 0 : index
    %c0_12 = arith.constant 0 : index
    %18 = vector.load %arg5[%c0_11, %c0_12] : memref<32x4xf32, #tpu.memory_space<vmem>>, vector<32x4xf32>
    %cst_13 = arith.constant dense<0.000000e+00> : vector<8x4xf32>
    %19 = tpu.matmul %16, %18, %cst_13 {dimension_numbers = #tpu.dot_dimension_numbers<[1], [0], [0], [1], [0, 0, 1, 1], [], []>} : vector<8x32xf32>, vector<32x4xf32>, vector<8x4xf32> -> vector<8x4xf32>
    %20 = arith.addf %17, %19 : vector<8x4xf32>
    %c0_14 = arith.constant 0 : index
    %c0_15 = arith.constant 0 : index
    %21 = vector.load %arg8[%c0_14, %c0_15] : memref<8x4xf32, #tpu.memory_space<vmem>>, vector<8x4xf32>
    tpu.vector_store %arg8[%c0_14, %c0_15], %20 {strides = array<i32>} : memref<8x4xf32, #tpu.memory_space<vmem>>, vector<8x4xf32>,
    %c0_i32_16 = arith.constant 0 : i32
    %22 = arith.cmpi eq, %arg1, %c0_i32_16 : i32
    %23 = arith.extui %22 : i1 to i32
    %c0_i32_17 = arith.constant 0 : i32
    %24 = arith.cmpi ne, %23, %c0_i32_17 : i32
    scf.if %24 {
      %c0_18 = arith.constant 0 : index
      %c0_19 = arith.constant 0 : index
      %25 = vector.load %arg8[%c0_18, %c0_19] : memref<8x4xf32, #tpu.memory_space<vmem>>, vector<8x4xf32>
      %c0_20 = arith.constant 0 : index
      %c0_21 = arith.constant 0 : index
      %26 = vector.load %arg6[%c0_20, %c0_21] : memref<1x4xf32, #tpu.memory_space<vmem>>, vector<1x4xf32>
      %27 = vector.broadcast %26 : vector<1x4xf32> to vector<8x4xf32>
      %28 = arith.addf %25, %27 : vector<8x4xf32>
      %c0_22 = arith.constant 0 : index
      %c0_23 = arith.constant 0 : index
      %29 = vector.load %arg7[%c0_22, %c0_23] : memref<8x4xf32, #tpu.memory_space<vmem>>, vector<8x4xf32>
      tpu.vector_store %arg7[%c0_22, %c0_23], %28 {strides = array<i32>} : memref<8x4xf32, #tpu.memory_space<vmem>>, vector<8x4xf32>,
    } else {
    }
    return
  }
  func.func @transform_0(%arg0: i32, %arg1: i32) -> (i32, i32) {
    %c0_i32 = arith.constant 0 : i32
    %c0_i32_0 = arith.constant 0 : i32
    return %arg0, %c0_i32 : i32, i32
  }
  func.func @transform_1(%arg0: i32, %arg1: i32) -> (i32, i32) {
    %c0_i32 = arith.constant 0 : i32
    %c0_i32_0 = arith.constant 0 : i32
    return %c0_i32, %arg1 : i32, i32
  }
  func.func @transform_2(%arg0: i32, %arg1: i32) -> (i32, i32) {
    %c0_i32 = arith.constant 0 : i32
    %c0_i32_0 = arith.constant 0 : i32
    return %c0_i32, %arg1 : i32, i32
  }
  func.func @transform_3(%arg0: i32, %arg1: i32) -> (i32, i32) {
    %c0_i32 = arith.constant 0 : i32
    %c0_i32_0 = arith.constant 0 : i32
    return %arg1, %c0_i32 : i32, i32
  }
  func.func @transform_4(%arg0: i32, %arg1: i32) -> (i32, i32) {
    %c0_i32 = arith.constant 0 : i32
    %c0_i32_0 = arith.constant 0 : i32
    %c0_i32_1 = arith.constant 0 : i32
    return %c0_i32, %c0_i32_0 : i32, i32
  }
  func.func @transform_5(%arg0: i32, %arg1: i32) -> (i32, i32) {
    %c0_i32 = arith.constant 0 : i32
    %c0_i32_0 = arith.constant 0 : i32
    return %arg0, %c0_i32 : i32, i32
  }
}

module attributes {stable_mosaic.version = 11 : i64} {
  func.func @mlp_kernel(%arg0: i32, %arg1: i32, %arg2: memref<8x4xf32, #tpu.memory_space<vmem>>, %arg3: memref<4x32xf32, #tpu.memory_space<vmem>>, %arg4: memref<1x32xf32, #tpu.memory_space<vmem>>, %arg5: memref<32x4xf32, #tpu.memory_space<vmem>>, %arg6: memref<1x4xf32, #tpu.memory_space<vmem>>, %arg7: memref<8x4xf32, #tpu.memory_space<vmem>>, %arg8: memref<8x4xf32, #tpu.memory_space<vmem>>) attributes {dimension_semantics = [#tpu.dimension_semantics<parallel>, #tpu.dimension_semantics<arbitrary>], iteration_bounds = array<i64: 2, 1>, scalar_prefetch = 0 : i64, scratch_operands = 1 : i64, tpu.core_type = #tpu.core_type<tc>, window_params = [{transform_indices = @transform_0, window_bounds = array<i64: 8, 4>}, {transform_indices = @transform_1, window_bounds = array<i64: 4, 32>}, {transform_indices = @transform_2, window_bounds = array<i64: 1, 32>}, {transform_indices = @transform_3, window_bounds = array<i64: 32, 4>}, {pipeline_mode = #tpu.pipeline_mode<synchronous>, transform_indices = @transform_4, window_bounds = array<i64: 1, 4>}, {transform_indices = @transform_5, window_bounds = array<i64: 8, 4>}]} {
    %c0_i32 = arith.constant 0 : i32
    %0 = arith.cmpi eq, %arg1, %c0_i32 : i32
    %1 = arith.extui %0 : i1 to i32
    %c0_i32_0 = arith.constant 0 : i32
    %2 = arith.cmpi ne, %1, %c0_i32_0 : i32
    scf.if %2 {
      %cst_18 = arith.constant 0.000000e+00 : f32
      %25 = vector.broadcast %cst_18 : f32 to vector<8x4xf32>
      %c0_19 = arith.constant 0 : index
      %c0_20 = arith.constant 0 : index
      %26 = vector.load %arg8[%c0_19, %c0_20] : memref<8x4xf32, #tpu.memory_space<vmem>>, vector<8x4xf32>
      tpu.vector_store %arg8[%c0_19, %c0_20], %25 {strides = array<i32>} : memref<8x4xf32, #tpu.memory_space<vmem>>, vector<8x4xf32>,
    } else {
    }
    %c0 = arith.constant 0 : index
    %c0_1 = arith.constant 0 : index
    %3 = vector.load %arg2[%c0, %c0_1] : memref<8x4xf32, #tpu.memory_space<vmem>>, vector<8x4xf32>
    %c0_2 = arith.constant 0 : index
    %c0_3 = arith.constant 0 : index
    %4 = vector.load %arg3[%c0_2, %c0_3] : memref<4x32xf32, #tpu.memory_space<vmem>>, vector<4x32xf32>
    %cst = arith.constant dense<0.000000e+00> : vector<8x32xf32>
    %5 = tpu.matmul %3, %4, %cst {dimension_numbers = #tpu.dot_dimension_numbers<[1], [0], [0], [1], [0, 0, 1, 1], [], []>} : vector<8x4xf32>, vector<4x32xf32>, vector<8x32xf32> -> vector<8x32xf32>
    %c0_4 = arith.constant 0 : index
    %c0_5 = arith.constant 0 : index
    %6 = vector.load %arg4[%c0_4, %c0_5] : memref<1x32xf32, #tpu.memory_space<vmem>>, vector<1x32xf32>
    %7 = vector.broadcast %6 : vector<1x32xf32> to vector<8x32xf32>
    %8 = arith.addf %5, %7 : vector<8x32xf32>
    %cst_6 = arith.constant 5.000000e-01 : f32
    %9 = vector.broadcast %cst_6 : f32 to vector<8x32xf32>
    %10 = arith.mulf %9, %8 : vector<8x32xf32>
    %cst_7 = arith.constant 0.707106769 : f32
    %11 = vector.broadcast %cst_7 : f32 to vector<8x32xf32>
    %12 = arith.mulf %8, %11 : vector<8x32xf32>
    %13 = math.erf %12 : vector<8x32xf32>
    %cst_8 = arith.constant 1.000000e+00 : f32
    %14 = vector.broadcast %cst_8 : f32 to vector<8x32xf32>
    %15 = arith.addf %14, %13 : vector<8x32xf32>
    %16 = arith.mulf %10, %15 : vector<8x32xf32>
    %c0_9 = arith.constant 0 : index
    %c0_10 = arith.constant 0 : index
    %17 = vector.load %arg8[%c0_9, %c0_10] : memref<8x4xf32, #tpu.memory_space<vmem>>, vector<8x4xf32>
    %c0_11 = arith.constant 0 : index
    %c0_12 = arith.constant 0 : index
    %18 = vector.load %arg5[%c0_11, %c0_12] : memref<32x4xf32, #tpu.memory_space<vmem>>, vector<32x4xf32>
    %cst_13 = arith.constant dense<0.000000e+00> : vector<8x4xf32>
    %19 = tpu.matmul %16, %18, %cst_13 {dimension_numbers = #tpu.dot_dimension_numbers<[1], [0], [0], [1], [0, 0, 1, 1], [], []>} : vector<8x32xf32>, vector<32x4xf32>, vector<8x4xf32> -> vector<8x4xf32>
    %20 = arith.addf %17, %19 : vector<8x4xf32>
    %c0_14 = arith.constant 0 : index
    %c0_15 = arith.constant 0 : index
    %21 = vector.load %arg8[%c0_14, %c0_15] : memref<8x4xf32, #tpu.memory_space<vmem>>, vector<8x4xf32>
    tpu.vector_store %arg8[%c0_14, %c0_15], %20 {strides = array<i32>} : memref<8x4xf32, #tpu.memory_space<vmem>>, vector<8x4xf32>,
    %c0_i32_16 = arith.constant 0 : i32
    %22 = arith.cmpi eq, %arg1, %c0_i32_16 : i32
    %23 = arith.extui %22 : i1 to i32
    %c0_i32_17 = arith.constant 0 : i32
    %24 = arith.cmpi ne, %23, %c0_i32_17 : i32
    scf.if %24 {
      %c0_18 = arith.constant 0 : index
      %c0_19 = arith.constant 0 : index
      %25 = vector.load %arg8[%c0_18, %c0_19] : memref<8x4xf32, #tpu.memory_space<vmem>>, vector<8x4xf32>
      %c0_20 = arith.constant 0 : index
      %c0_21 = arith.constant 0 : index
      %26 = vector.load %arg6[%c0_20, %c0_21] : memref<1x4xf32, #tpu.memory_space<vmem>>, vector<1x4xf32>
      %27 = vector.broadcast %26 : vector<1x4xf32> to vector<8x4xf32>
      %28 = arith.addf %25, %27 : vector<8x4xf32>
      %c0_22 = arith.constant 0 : index
      %c0_23 = arith.constant 0 : index
      %29 = vector.load %arg7[%c0_22, %c0_23] : memref<8x4xf32, #tpu.memory_space<vmem>>, vector<8x4xf32>
      tpu.vector_store %arg7[%c0_22, %c0_23], %28 {strides = array<i32>} : memref<8x4xf32, #tpu.memory_space<vmem>>, vector<8x4xf32>,
    } else {
    }
    return
  }
  func.func @transform_0(%arg0: i32, %arg1: i32) -> (i32, i32) {
    %c0_i32 = arith.constant 0 : i32
    %c0_i32_0 = arith.constant 0 : i32
    return %arg0, %c0_i32 : i32, i32
  }
  func.func @transform_1(%arg0: i32, %arg1: i32) -> (i32, i32) {
    %c0_i32 = arith.constant 0 : i32
    %c0_i32_0 = arith.constant 0 : i32
    return %c0_i32, %arg1 : i32, i32
  }
  func.func @transform_2(%arg0: i32, %arg1: i32) -> (i32, i32) {
    %c0_i32 = arith.constant 0 : i32
    %c0_i32_0 = arith.constant 0 : i32
    return %c0_i32, %arg1 : i32, i32
  }
  func.func @transform_3(%arg0: i32, %arg1: i32) -> (i32, i32) {
    %c0_i32 = arith.constant 0 : i32
    %c0_i32_0 = arith.constant 0 : i32
    return %arg1, %c0_i32 : i32, i32
  }
  func.func @transform_4(%arg0: i32, %arg1: i32) -> (i32, i32) {
    %c0_i32 = arith.constant 0 : i32
    %c0_i32_0 = arith.constant 0 : i32
    %c0_i32_1 = arith.constant 0 : i32
    return %c0_i32, %c0_i32_0 : i32, i32
  }
  func.func @transform_5(%arg0: i32, %arg1: i32) -> (i32, i32) {
    %c0_i32 = arith.constant 0 : i32
    %c0_i32_0 = arith.constant 0 : i32
    return %arg0, %c0_i32 : i32, i32
  }
}

</mosaic_0001>

<llo_original>
// kernel: tpu_custom_call.1
$region0: #{tpu_custom_call.1}
  #allocation0 [shape = 'u32[]', space=smem, size = 0x4, offset = 0x4, fixed_abs, tag = 'smem constant byte address 0x4 - core index']
  #allocation1 [shape = 'u32[144,128]{1,0:T(1,128)}', space=vmem, size = 0x12000, scoped, tag = 'internal scratch']
  #allocation2 [shape = 'f32[8,4]{1,0:T(8,128)}', space=vmem, size = 0x1000, scoped, tag = 'scratch operand']
  %s0 = inlined_call_operand.vmem [shape: f32[16,4], index: 0, kind: input, shape index: {}]
  %s1 = inlined_call_operand.vmem [shape: f32[4,32], index: 1, kind: input, shape index: {}]
  %s2 = inlined_call_operand.vmem [shape: f32[1,32], index: 2, kind: input, shape index: {}]
  %s3 = inlined_call_operand.vmem [shape: f32[32,4], index: 3, kind: input, shape index: {}]
  %s4 = inlined_call_operand.vmem [shape: f32[1,4], index: 4, kind: input, shape index: {}]
  %s5 = inlined_call_operand.vmem [shape: f32[16,4], index: 5, kind: output, shape index: {}]
  %s6 = sld [smem:[#allocation0]]
  $region61: #{tpu_custom_call.1} parent=0
    _
  %s8 = ssub.s32 1, %s6
  %s9 = scalar_select 0, %s8, %s6
  loop: start=0, step=1, limit=4
  $region2: #{tpu_custom_call.1} parent=0 // loop_pre_header
    _
  $region3: #{tpu_custom_call.1} parent=0 // loop_header
    %s11 = sphi 0, %s15
    %p12 = scmp.ge.s32.totalorder %s11, 4
    %s18 = sphi 0, %s30
    %s19 = sphi 0, %s26
    %s20 = sphi 0, %s18
    %s21 = sphi 0, %s19
    %s22 = sphi 0, %s20
    %s23 = sphi 0, %s21
    %s33 = sphi 0, %s35
    %s36 = sphi 0, %s33
    %s37 = sphi 0, %s36
    %s53 = sphi 0, %s37
    %s59 = sphi 0, %s61
    %s62 = sphi 0, %s59
    %s63 = sphi 0, %s62
    %s79 = sphi 0, %s63
    %s85 = sphi 0, %s87
    %s88 = sphi 0, %s85
    %s89 = sphi 0, %s88
    %s105 = sphi 0, %s89
    %s111 = sphi 0, %s113
    %s114 = sphi 0, %s111
    %s115 = sphi 0, %s114
    %s131 = sphi 0, %s115
    %s135 = sphi 0, %s135
    %s137 = sphi 0, %s135
    %s138 = sphi 0, %s137
    %s152 = sphi 0, %s138
    %s158 = sphi 0, %s160
    %s161 = sphi 0, %s158
    %s162 = sphi 0, %s161
    %s178 = sphi 0, %s162
  $region4: #{tpu_custom_call.1} parent=0 // loop_header_branch
    %14 = sbr.rel (%p12) target = $region8
  $region5: #{tpu_custom_call.1} parent=0 // loop_body
    %s16 = ssub.s32 %s11, 1
    %s17 = ssub.s32 %s11, 2
    %s24 = sadd.s32 1, %s19
    %p25 = scmp.ge.s32.totalorder %s24, 1
    %s26 = scalar_select %p25, 0, %s24
    %s27 = sadd.s32 1, %s18
    %s28 = scalar_select %p25, %s27, %s18
    %p29 = scmp.ge.s32.totalorder %s28, 2
    %s30 = scalar_select %p29, 0, %s28
    %s31 = ssub.s32 %s18, %s30
    %p32 = scmp.eq.s32.totalorder %s31, 0
    %s34 = sadd.s32 %s33, 1
    %s35 = scalar_select %p32, %s33, %s34
    %p38 = pneg %p32
    %p39 = scmp.eq.s32.totalorder %s11, 1
    %p40 = por %p38, %p39
    %p41 = scmp.ne.s32.totalorder %s33, %s36
    %p42 = scmp.eq.s32.totalorder %s11, 0
    %p43 = por %p41, %p42
    %p44 = scmp.ne.s32.totalorder %s33, %s36
    %p45 = scmp.eq.s32.totalorder %s16, 1
    %p46 = por %p44, %p45
    %p47 = scmp.ne.s32.totalorder %s36, %s37
    %p48 = scmp.eq.s32.totalorder %s16, 0
    %p49 = por %p47, %p48
    %p50 = scmp.ne.s32.totalorder %s36, %s37
    %p51 = scmp.eq.s32.totalorder %s17, 1
    %p52 = por %p50, %p51
    %p54 = scmp.ne.s32.totalorder %s37, %s53
    %p55 = scmp.eq.s32.totalorder %s17, 0
    %p56 = por %p54, %p55
    %s57 = ssub.s32 %s19, %s26
    %p58 = scmp.eq.s32.totalorder %s57, 0
    %s60 = sadd.s32 %s59, 1
    %s61 = scalar_select %p58, %s59, %s60
    %p64 = pneg %p58
    %p65 = scmp.eq.s32.totalorder %s11, 1
    %p66 = por %p64, %p65
    %p67 = scmp.ne.s32.totalorder %s59, %s62
    %p68 = scmp.eq.s32.totalorder %s11, 0
    %p69 = por %p67, %p68
    %p70 = scmp.ne.s32.totalorder %s59, %s62
    %p71 = scmp.eq.s32.totalorder %s16, 1
    %p72 = por %p70, %p71
    %p73 = scmp.ne.s32.totalorder %s62, %s63
    %p74 = scmp.eq.s32.totalorder %s16, 0
    %p75 = por %p73, %p74
    %p76 = scmp.ne.s32.totalorder %s62, %s63
    %p77 = scmp.eq.s32.totalorder %s17, 1
    %p78 = por %p76, %p77
    %p80 = scmp.ne.s32.totalorder %s63, %s79
    %p81 = scmp.eq.s32.totalorder %s17, 0
    %p82 = por %p80, %p81
    %s83 = ssub.s32 %s19, %s26
    %p84 = scmp.eq.s32.totalorder %s83, 0
    %s86 = sadd.s32 %s85, 1
    %s87 = scalar_select %p84, %s85, %s86
    %p90 = pneg %p84
    %p91 = scmp.eq.s32.totalorder %s11, 1
    %p92 = por %p90, %p91
    %p93 = scmp.ne.s32.totalorder %s85, %s88
    %p94 = scmp.eq.s32.totalorder %s11, 0
    %p95 = por %p93, %p94
    %p96 = scmp.ne.s32.totalorder %s85, %s88
    %p97 = scmp.eq.s32.totalorder %s16, 1
    %p98 = por %p96, %p97
    %p99 = scmp.ne.s32.totalorder %s88, %s89
    %p100 = scmp.eq.s32.totalorder %s16, 0
    %p101 = por %p99, %p100
    %p102 = scmp.ne.s32.totalorder %s88, %s89
    %p103 = scmp.eq.s32.totalorder %s17, 1
    %p104 = por %p102, %p103
    %p106 = scmp.ne.s32.totalorder %s89, %s105
    %p107 = scmp.eq.s32.totalorder %s17, 0
    %p108 = por %p106, %p107
    %s109 = ssub.s32 %s19, %s26
    %p110 = scmp.eq.s32.totalorder %s109, 0
    %s112 = sadd.s32 %s111, 1
    %s113 = scalar_select %p110, %s111, %s112
    %p116 = pneg %p110
    %p117 = scmp.eq.s32.totalorder %s11, 1
    %p118 = por %p116, %p117
    %p119 = scmp.ne.s32.totalorder %s111, %s114
    %p120 = scmp.eq.s32.totalorder %s11, 0
    %p121 = por %p119, %p120
    %p122 = scmp.ne.s32.totalorder %s111, %s114
    %p123 = scmp.eq.s32.totalorder %s16, 1
    %p124 = por %p122, %p123
    %p125 = scmp.ne.s32.totalorder %s114, %s115
    %p126 = scmp.eq.s32.totalorder %s16, 0
    %p127 = por %p125, %p126
    %p128 = scmp.ne.s32.totalorder %s114, %s115
    %p129 = scmp.eq.s32.totalorder %s17, 1
    %p130 = por %p128, %p129
    %p132 = scmp.ne.s32.totalorder %s115, %s131
    %p133 = scmp.eq.s32.totalorder %s17, 0
    %p134 = por %p132, %p133
    %s136 = sadd.s32 %s135, 1
    %p139 = scmp.eq.s32.totalorder %s11, 1
    %p140 = scmp.ne.s32.totalorder %s135, %s137
    %p141 = scmp.eq.s32.totalorder %s11, 0
    %p142 = por %p140, %p141
    %p143 = scmp.ne.s32.totalorder %s135, %s137
    %p144 = scmp.eq.s32.totalorder %s16, 1
    %p145 = por %p143, %p144
    %p146 = scmp.ne.s32.totalorder %s137, %s138
    %p147 = scmp.eq.s32.totalorder %s16, 0
    %p148 = por %p146, %p147
    %p149 = scmp.ne.s32.totalorder %s137, %s138
    %p150 = scmp.eq.s32.totalorder %s17, 1
    %p151 = por %p149, %p150
    %p153 = scmp.ne.s32.totalorder %s138, %s152
    %p154 = scmp.eq.s32.totalorder %s17, 0
    %p155 = por %p153, %p154
    %s156 = ssub.s32 %s18, %s30
    %p157 = scmp.eq.s32.totalorder %s156, 0
    %s159 = sadd.s32 %s158, 1
    %s160 = scalar_select %p157, %s158, %s159
    %p163 = pneg %p157
    %p164 = scmp.eq.s32.totalorder %s11, 1
    %p165 = por %p163, %p164
    %p166 = scmp.ne.s32.totalorder %s158, %s161
    %p167 = scmp.eq.s32.totalorder %s11, 0
    %p168 = por %p166, %p167
    %p169 = scmp.ne.s32.totalorder %s158, %s161
    %p170 = scmp.eq.s32.totalorder %s16, 1
    %p171 = por %p169, %p170
    %p172 = scmp.ne.s32.totalorder %s161, %s162
    %p173 = scmp.eq.s32.totalorder %s16, 0
    %p174 = por %p172, %p173
    %p175 = scmp.ne.s32.totalorder %s161, %s162
    %p176 = scmp.eq.s32.totalorder %s17, 1
    %p177 = por %p175, %p176
    %p179 = scmp.ne.s32.totalorder %s162, %s178
    %p180 = scmp.eq.s32.totalorder %s17, 0
    %p181 = por %p179, %p180
    %p182 = scmp.le.s32.totalorder 1, %s11
    %p183 = scmp.lt.s32.totalorder %s11, 3
    %p184 = pnand %p182, %p183
    %p185 = pneg %p184
    // Predicated region
    $region9: #{tpu_custom_call.1} parent=5 // pred_check
      _
    $region10: #{tpu_custom_call.1} parent=5 // pred_check_branch
      %187 = sbr.rel (%p184) target = $region12
    $region11: #{tpu_custom_call.1} parent=5 // pred_region
      %s188 = ssub.s32 %s11, 1
      // Predicated region
      $region13: #{tpu_custom_call.1} parent=11 // pred_check
        %p189 = pneg %p75
      $region14: #{tpu_custom_call.1} parent=11 // pred_check_branch
        %191 = sbr.rel (%p189) target = $region16
      $region15: #{tpu_custom_call.1} parent=11 // pred_region
        %p192 = scmp.lt.s32.totalorder %s21, 0
        %s193 = scalar_select %p192, %s21, 0
        %s194 = smul.addr %s193, 4
        %s195 = scalar_lea.vmem %s1, %s194
      $region16: #{tpu_custom_call.1} parent=11 // pred_fallthru
        _
      // Predicated region
      $region17: #{tpu_custom_call.1} parent=11 // pred_check
        %p196 = pneg %p101
      $region18: #{tpu_custom_call.1} parent=11 // pred_check_branch
        %198 = sbr.rel (%p196) target = $region20
      $region19: #{tpu_custom_call.1} parent=11 // pred_region
        %p199 = scmp.lt.s32.totalorder %s21, 0
        %s200 = scalar_select %p199, %s21, 0
        %s201 = scalar_lea.vmem %s2, %s200
      $region20: #{tpu_custom_call.1} parent=11 // pred_fallthru
        _
      // Predicated region
      $region21: #{tpu_custom_call.1} parent=11 // pred_check
        %p202 = pneg %p127
      $region22: #{tpu_custom_call.1} parent=11 // pred_check_branch
        %204 = sbr.rel (%p202) target = $region24
      $region23: #{tpu_custom_call.1} parent=11 // pred_region
        %s205 = smul.u32 4, %s21
        %p206 = scmp.lt.s32.totalorder %s205, 3
        %s207 = scalar_select %p206, %s205, 3
        %s208 = smul.addr %s207, 8
        %s209 = scalar_lea.vmem %s3, %s208
        %s210 = smul.u32 4, %s21
      $region24: #{tpu_custom_call.1} parent=11 // pred_fallthru
        _
      // Predicated region
      $region25: #{tpu_custom_call.1} parent=11 // pred_check
        %p211 = pneg %p148
      $region26: #{tpu_custom_call.1} parent=11 // pred_check_branch
        %213 = sbr.rel (%p211) target = $region28
      $region27: #{tpu_custom_call.1} parent=11 // pred_region
        _
      $region28: #{tpu_custom_call.1} parent=11 // pred_fallthru
        _
    $region12: #{tpu_custom_call.1} parent=5 // pred_fallthru
      _
    %p214 = scmp.lt.s32.totalorder %s11, 2
    // Predicated region
    $region29: #{tpu_custom_call.1} parent=5 // pred_check
      %p215 = pneg %p214
    $region30: #{tpu_custom_call.1} parent=5 // pred_check_branch
      %217 = sbr.rel (%p215) target = $region32
    $region31: #{tpu_custom_call.1} parent=5 // pred_region
      // Predicated region
      $region33: #{tpu_custom_call.1} parent=31 // pred_check
        %p218 = pneg %p43
      $region34: #{tpu_custom_call.1} parent=31 // pred_check_branch
        %220 = sbr.rel (%p218) target = $region36
      $region35: #{tpu_custom_call.1} parent=31 // pred_region
        %p221 = scmp.lt.s32.totalorder %s18, 1
        %s222 = scalar_select %p221, %s18, 1
        %s223 = smul.addr %s222, 8
        %s224 = scalar_lea.vmem %s0, %s223
      $region36: #{tpu_custom_call.1} parent=31 // pred_fallthru
        _
    $region32: #{tpu_custom_call.1} parent=5 // pred_fallthru
      _
    %p225 = scmp.le.s32.totalorder 1, %s11
    %p226 = scmp.lt.s32.totalorder %s11, 3
    %p227 = pnand %p225, %p226
    %p228 = pneg %p227
    // Predicated region
    $region37: #{tpu_custom_call.1} parent=5 // pred_check
      _
    $region38: #{tpu_custom_call.1} parent=5 // pred_check_branch
      %230 = sbr.rel (%p227) target = $region40
    $region39: #{tpu_custom_call.1} parent=5 // pred_region
      %s231 = ssub.s32 %s11, 1
      %p232 = scmp.lt.s32.totalorder %s20, 1
      %s233 = scalar_select %p232, %s20, 1
      %s234 = smul.addr %s233, 8
      %s235 = scalar_lea.vmem %s0, %s234
      %p236 = pneg %p49
      %p237 = pneg %p46
      %p238 = scmp.lt.s32.totalorder %s21, 0
      %s239 = scalar_select %p238, %s21, 0
      %s240 = smul.addr %s239, 4
      %s241 = scalar_lea.vmem %s1, %s240
      %p242 = pneg %p75
      %p243 = pneg %p72
      %p244 = scmp.lt.s32.totalorder %s21, 0
      %s245 = scalar_select %p244, %s21, 0
      %s246 = scalar_lea.vmem %s2, %s245
      %p247 = pneg %p101
      %p248 = pneg %p98
      %s249 = smul.u32 4, %s21
      %p250 = scmp.lt.s32.totalorder %s249, 3
      %s251 = scalar_select %p250, %s249, 3
      %s252 = smul.addr %s251, 8
      %s253 = scalar_lea.vmem %s3, %s252
      %p254 = pneg %p127
      %p255 = pneg %p124
      %p256 = pneg %p148
      %p257 = pneg %p145
      %p258 = pneg %p174
      %p259 = pneg %p171
      %p260 = scmp.lt.s32.totalorder %s20, 1
      %s261 = scalar_select %p260, %s20, 1
      %s262 = smul.addr %s261, 8
      %s263 = scalar_lea.vmem %s5, %s262
      %p264 = scmp.lt.s32.totalorder %s20, 1
      %s265 = scalar_select %p264, %s20, 1
      %s266 = smul.addr %s265, 8
      %s267 = scalar_lea.vmem %s0, %s266
      %p268 = scmp.lt.s32.totalorder %s21, 0
      %s269 = scalar_select %p268, %s21, 0
      %s270 = smul.addr %s269, 4
      %s271 = scalar_lea.vmem %s1, %s270
      %p272 = scmp.lt.s32.totalorder %s21, 0
      %s273 = scalar_select %p272, %s21, 0
      %s274 = scalar_lea.vmem %s2, %s273
      %s275 = smul.u32 4, %s21
      %p276 = scmp.lt.s32.totalorder %s275, 3
      %s277 = scalar_select %p276, %s275, 3
      %s278 = smul.addr %s277, 8
      %s279 = scalar_lea.vmem %s3, %s278
      %s280 = smul.u32 4, %s21
      %p281 = scmp.lt.s32.totalorder %s20, 1
      %s282 = scalar_select %p281, %s20, 1
      %s283 = smul.addr %s282, 8
      %s284 = scalar_lea.vmem %s5, %s283
      %p285 = scmp.eq.s32.totalorder %s21, 0
      // Predicated region
      $region41: #{tpu_custom_call.1} parent=39 // pred_check
        %p286 = pneg %p285
      $region42: #{tpu_custom_call.1} parent=39 // pred_check_branch
        %288 = sbr.rel (%p286) target = $region44
      $region43: #{tpu_custom_call.1} parent=39 // pred_region
        %vm289 = vcmask 31744
        %290 = vst.msk [vmem:[#allocation2] sm:$0xff] %vm289, 0.0
      $region44: #{tpu_custom_call.1} parent=39 // pred_fallthru
        _
      %v291 = vld [vmem:[%s267] sm:$0xff]
      %v292 = vld [vmem:[%s271] sm:$0xf]
      %v293 = vld [vmem:[%s274] sm:$0x1]
      %v295 = vlaneseq
      %v296 = vshrl.u32 %v295, 7
      %v297 = vsub.s32 0, %v296
      %v298 = vrot.slane %v293, %v297
      %vm300 = vcmask 31744
      %v302 = vsel %vm300, %v291, 0
      %vm304 = vcmask 1043456
      %v306 = vsel %vm304, %v292, 0
      %308 = vmatprep.subr.mxu0 0.0
      %309 = vmatpush1.msra.mxu0 0.0
      %310 = vmatprep.subr.mxu0 0.0
      %311 = vmatpush1.msra.mxu0 0.0
      %312 = vmatprep.subr.mxu0 0.0
      %313 = vmatpush1.msra.mxu0 0.0
      %314 = vmatprep.subr.mxu0 0.0
      %315 = vmatpush1.msra.mxu0 0.0
      %316 = vmatprep.subr.mxu0 0.0
      %317 = vmatpush1.msra.mxu0 0.0
      %318 = vmatprep.subr.mxu0 0.0
      %319 = vmatpush1.msra.mxu0 0.0
      %320 = vmatprep.subr.mxu0 0.0
      %321 = vmatpush1.msra.mxu0 0.0
      %322 = vmatprep.subr.mxu0 0.0
      %323 = vmatpush1.msra.mxu0 0.0
      %324 = vmatprep.subr.mxu0 0.0
      %325 = vmatpush1.msra.mxu0 0.0
      %326 = vmatprep.subr.mxu0 0.0
      %327 = vmatpush1.msra.mxu0 0.0
      %328 = vmatprep.subr.mxu0 0.0
      %329 = vmatpush1.msra.mxu0 0.0
      %330 = vmatprep.subr.mxu0 0.0
      %331 = vmatpush1.msra.mxu0 0.0
      %332 = vmatprep.subr.mxu0 0.0
      %333 = vmatpush1.msra.mxu0 0.0
      %334 = vmatprep.subr.mxu0 0.0
      %335 = vmatpush1.msra.mxu0 0.0
      %336 = vmatprep.subr.mxu0 0.0
      %337 = vmatpush1.msra.mxu0 0.0
      %338 = vmatprep.subr.mxu0 0.0
      %339 = vmatpush1.msra.mxu0 %v306
      %340 = vmatprep.subr.mxu0 0.0
      %341 = vmatpush2.msra.mxu0 0.0
      %342 = vmatprep.subr.mxu0 0.0
      %343 = vmatpush2.msra.mxu0 0.0
      %344 = vmatprep.subr.mxu0 0.0
      %345 = vmatpush2.msra.mxu0 0.0
      %346 = vmatprep.subr.mxu0 0.0
      %347 = vmatpush2.msra.mxu0 0.0
      %348 = vmatprep.subr.mxu0 0.0
      %349 = vmatpush2.msra.mxu0 0.0
      %350 = vmatprep.subr.mxu0 0.0
      %351 = vmatpush2.msra.mxu0 0.0
      %352 = vmatprep.subr.mxu0 0.0
      %353 = vmatpush2.msra.mxu0 0.0
      %354 = vmatprep.subr.mxu0 0.0
      %355 = vmatpush2.msra.mxu0 0.0
      %356 = vmatprep.subr.mxu0 0.0
      %357 = vmatpush2.msra.mxu0 0.0
      %358 = vmatprep.subr.mxu0 0.0
      %359 = vmatpush2.msra.mxu0 0.0
      %360 = vmatprep.subr.mxu0 0.0
      %361 = vmatpush2.msra.mxu0 0.0
      %362 = vmatprep.subr.mxu0 0.0
      %363 = vmatpush2.msra.mxu0 0.0
      %364 = vmatprep.subr.mxu0 0.0
      %365 = vmatpush2.msra.mxu0 0.0
      %366 = vmatprep.subr.mxu0 0.0
      %367 = vmatpush2.msra.mxu0 0.0
      %368 = vmatprep.subr.mxu0 0.0
      %369 = vmatpush2.msra.mxu0 0.0
      %370 = vmatprep.subr.mxu0 0.0
      %371 = vmatpush2.msra.mxu0 0.0
      %372 = vmatprep.mubr.f32.mxu0 0.0
      %373 = vmatmul.mubr.f32.gmra.mxu0 %v302
      %v374 = vpop.f32.mrf.mxu0
      %v375 = vadd.f32 %v298, %v374
      %v376 = vpop.f32.mrf.mxu0
      %377 = vdwg.mxu0
      %v378 = vmul.f32 %v375, 0.5
      %v379 = vmul.f32 %v375, 0.70710677
      %v380 = verf.f32.pop %v379
      %v381 = vadd.f32 %v380, 1.0
      %v382 = vmul.f32 %v378, %v381
      %v383 = vld [vmem:[#allocation2] sm:$0xff]
      %v384 = vld [vmem:[%s279] sm:$0xff]
      %v385 = vld [vmem:[%s279 + $0x8] sm:$0xff]
      %v386 = vld [vmem:[%s279 + $0x10] sm:$0xff]
      %v387 = vld [vmem:[%s279 + $0x18] sm:$0xff]
      %vm388 = vcmask 261120
      %v390 = vsel %vm388, %v382, 0
      %392 = vmatprep.subr.mxu0 0.0
      %393 = vmatpush1.msra.mxu0 0.0
      %394 = vmatprep.subr.mxu0 0.0
      %395 = vmatpush1.msra.mxu0 0.0
      %396 = vmatprep.subr.mxu0 0.0
      %397 = vmatpush1.msra.mxu0 0.0
      %398 = vmatprep.subr.mxu0 0.0
      %399 = vmatpush1.msra.mxu0 0.0
      %400 = vmatprep.subr.mxu0 0.0
      %401 = vmatpush1.msra.mxu0 0.0
      %402 = vmatprep.subr.mxu0 0.0
      %403 = vmatpush1.msra.mxu0 0.0
      %404 = vmatprep.subr.mxu0 0.0
      %405 = vmatpush1.msra.mxu0 0.0
      %406 = vmatprep.subr.mxu0 0.0
      %407 = vmatpush1.msra.mxu0 0.0
      %408 = vmatprep.subr.mxu0 0.0
      %409 = vmatpush1.msra.mxu0 0.0
      %410 = vmatprep.subr.mxu0 0.0
      %411 = vmatpush1.msra.mxu0 0.0
      %412 = vmatprep.subr.mxu0 0.0
      %413 = vmatpush1.msra.mxu0 0.0
      %414 = vmatprep.subr.mxu0 0.0
      %415 = vmatpush1.msra.mxu0 0.0
      %416 = vmatprep.subr.mxu0 0.0
      %417 = vmatpush1.msra.mxu0 %v387
      %418 = vmatprep.subr.mxu0 0.0
      %419 = vmatpush1.msra.mxu0 %v386
      %420 = vmatprep.subr.mxu0 0.0
      %421 = vmatpush1.msra.mxu0 %v385
      %422 = vmatprep.subr.mxu0 0.0
      %423 = vmatpush1.msra.mxu0 %v384
      %424 = vmatprep.subr.mxu0 0.0
      %425 = vmatpush2.msra.mxu0 0.0
      %426 = vmatprep.subr.mxu0 0.0
      %427 = vmatpush2.msra.mxu0 0.0
      %428 = vmatprep.subr.mxu0 0.0
      %429 = vmatpush2.msra.mxu0 0.0
      %430 = vmatprep.subr.mxu0 0.0
      %431 = vmatpush2.msra.mxu0 0.0
      %432 = vmatprep.subr.mxu0 0.0
      %433 = vmatpush2.msra.mxu0 0.0
      %434 = vmatprep.subr.mxu0 0.0
      %435 = vmatpush2.msra.mxu0 0.0
      %436 = vmatprep.subr.mxu0 0.0
      %437 = vmatpush2.msra.mxu0 0.0
      %438 = vmatprep.subr.mxu0 0.0
      %439 = vmatpush2.msra.mxu0 0.0
      %440 = vmatprep.subr.mxu0 0.0
      %441 = vmatpush2.msra.mxu0 0.0
      %442 = vmatprep.subr.mxu0 0.0
      %443 = vmatpush2.msra.mxu0 0.0
      %444 = vmatprep.subr.mxu0 0.0
      %445 = vmatpush2.msra.mxu0 0.0
      %446 = vmatprep.subr.mxu0 0.0
      %447 = vmatpush2.msra.mxu0 0.0
      %448 = vmatprep.subr.mxu0 0.0
      %449 = vmatpush2.msra.mxu0 0.0
      %450 = vmatprep.subr.mxu0 0.0
      %451 = vmatpush2.msra.mxu0 0.0
      %452 = vmatprep.subr.mxu0 0.0
      %453 = vmatpush2.msra.mxu0 0.0
      %454 = vmatprep.subr.mxu0 0.0
      %455 = vmatpush2.msra.mxu0 0.0
      %456 = vmatprep.mubr.f32.mxu0 0.0
      %457 = vmatmul.mubr.f32.gmra.mxu0 %v390
      %v458 = vpop.f32.mrf.mxu0
      %v459 = vadd.f32 0.0, %v458
      %v460 = vpop.f32.mrf.mxu0
      %461 = vdwg.mxu0
      %v462 = vadd.f32 %v383, %v459
      %463 = vst.msk [vmem:[#allocation2] sm:$0xff] %vm300, %v462
      // Predicated region
      $region45: #{tpu_custom_call.1} parent=39 // pred_check
        %p464 = pneg %p285
      $region46: #{tpu_custom_call.1} parent=39 // pred_check_branch
        %466 = sbr.rel (%p464) target = $region48
      $region47: #{tpu_custom_call.1} parent=39 // pred_region
        %v467 = vld [vmem:[#allocation2] sm:$0xff]
        %v468 = vld [vmem:[%s4] sm:$0x1]
        %v470 = vlaneseq
        %v471 = vshrl.u32 %v470, 7
        %v472 = vsub.s32 0, %v471
        %v473 = vrot.slane %v468, %v472
        %v475 = vadd.f32 %v467, %v473
        %476 = vst.msk [vmem:[%s284] sm:$0xff] %vm300, %v475
      $region48: #{tpu_custom_call.1} parent=39 // pred_fallthru
        _
      %p477 = scmp.lt.s32.totalorder %s20, 1
      %s478 = scalar_select %p477, %s20, 1
      %s479 = smul.addr %s478, 8
      %s480 = scalar_lea.vmem %s5, %s479
      // Predicated region
      $region49: #{tpu_custom_call.1} parent=39 // pred_check
        %p481 = pneg %p171
      $region50: #{tpu_custom_call.1} parent=39 // pred_check_branch
        %483 = sbr.rel (%p481) target = $region52
      $region51: #{tpu_custom_call.1} parent=39 // pred_region
        _
      $region52: #{tpu_custom_call.1} parent=39 // pred_fallthru
        _
    $region40: #{tpu_custom_call.1} parent=5 // pred_fallthru
      _
    %p484 = scmp.le.s32.totalorder 2, %s11
    // Predicated region
    $region53: #{tpu_custom_call.1} parent=5 // pred_check
      %p485 = pneg %p484
    $region54: #{tpu_custom_call.1} parent=5 // pred_check_branch
      %487 = sbr.rel (%p485) target = $region56
    $region55: #{tpu_custom_call.1} parent=5 // pred_region
      %s488 = ssub.s32 %s11, 2
      // Predicated region
      $region57: #{tpu_custom_call.1} parent=55 // pred_check
        %p489 = pneg %p177
      $region58: #{tpu_custom_call.1} parent=55 // pred_check_branch
        %491 = sbr.rel (%p489) target = $region60
      $region59: #{tpu_custom_call.1} parent=55 // pred_region
        %p492 = scmp.lt.s32.totalorder %s22, 1
        %s493 = scalar_select %p492, %s22, 1
        %s494 = smul.addr %s493, 8
        %s495 = scalar_lea.vmem %s5, %s494
      $region60: #{tpu_custom_call.1} parent=55 // pred_fallthru
        _
    $region56: #{tpu_custom_call.1} parent=5 // pred_fallthru
      _
  $region6: #{tpu_custom_call.1} parent=0 // loop_footer
    %s15 = sadd.s32 1, %s11
  $region7: #{tpu_custom_call.1} parent=0 // loop_footer_branch
    %10 = sbr.rel target = $region3
  $region8: #{tpu_custom_call.1} parent=0 // loop_exit
    _

// kernel: tpu_custom_call.1
$region0: #{tpu_custom_call.1}
  #allocation0 [shape = 'u32[]', space=smem, size = 0x4, offset = 0x4, fixed_abs, tag = 'smem constant byte address 0x4 - core index']
  #allocation1 [shape = 'u32[144,128]{1,0:T(1,128)}', space=vmem, size = 0x12000, scoped, tag = 'internal scratch']
  #allocation2 [shape = 'f32[8,4]{1,0:T(8,128)}', space=vmem, size = 0x1000, scoped, tag = 'scratch operand']
  %s0 = inlined_call_operand.vmem [shape: f32[16,4], index: 0, kind: input, shape index: {}]
  %s1 = inlined_call_operand.vmem [shape: f32[4,32], index: 1, kind: input, shape index: {}]
  %s2 = inlined_call_operand.vmem [shape: f32[1,32], index: 2, kind: input, shape index: {}]
  %s3 = inlined_call_operand.vmem [shape: f32[32,4], index: 3, kind: input, shape index: {}]
  %s4 = inlined_call_operand.vmem [shape: f32[1,4], index: 4, kind: input, shape index: {}]
  %s5 = inlined_call_operand.vmem [shape: f32[16,4], index: 5, kind: output, shape index: {}]
  %s6 = sld [smem:[#allocation0]]
  $region61: #{tpu_custom_call.1} parent=0
    _
  %s8 = ssub.s32 1, %s6
  %s9 = scalar_select 0, %s8, %s6
  loop: start=0, step=1, limit=4
  $region2: #{tpu_custom_call.1} parent=0 // loop_pre_header
    _
  $region3: #{tpu_custom_call.1} parent=0 // loop_header
    %s11 = sphi 0, %s15
    %p12 = scmp.ge.s32.totalorder %s11, 4
    %s18 = sphi 0, %s30
    %s19 = sphi 0, %s26
    %s20 = sphi 0, %s18
    %s21 = sphi 0, %s19
    %s22 = sphi 0, %s20
    %s23 = sphi 0, %s21
    %s33 = sphi 0, %s35
    %s36 = sphi 0, %s33
    %s37 = sphi 0, %s36
    %s53 = sphi 0, %s37
    %s59 = sphi 0, %s61
    %s62 = sphi 0, %s59
    %s63 = sphi 0, %s62
    %s79 = sphi 0, %s63
    %s85 = sphi 0, %s87
    %s88 = sphi 0, %s85
    %s89 = sphi 0, %s88
    %s105 = sphi 0, %s89
    %s111 = sphi 0, %s113
    %s114 = sphi 0, %s111
    %s115 = sphi 0, %s114
    %s131 = sphi 0, %s115
    %s135 = sphi 0, %s135
    %s137 = sphi 0, %s135
    %s138 = sphi 0, %s137
    %s152 = sphi 0, %s138
    %s158 = sphi 0, %s160
    %s161 = sphi 0, %s158
    %s162 = sphi 0, %s161
    %s178 = sphi 0, %s162
  $region4: #{tpu_custom_call.1} parent=0 // loop_header_branch
    %14 = sbr.rel (%p12) target = $region8
  $region5: #{tpu_custom_call.1} parent=0 // loop_body
    %s16 = ssub.s32 %s11, 1
    %s17 = ssub.s32 %s11, 2
    %s24 = sadd.s32 1, %s19
    %p25 = scmp.ge.s32.totalorder %s24, 1
    %s26 = scalar_select %p25, 0, %s24
    %s27 = sadd.s32 1, %s18
    %s28 = scalar_select %p25, %s27, %s18
    %p29 = scmp.ge.s32.totalorder %s28, 2
    %s30 = scalar_select %p29, 0, %s28
    %s31 = ssub.s32 %s18, %s30
    %p32 = scmp.eq.s32.totalorder %s31, 0
    %s34 = sadd.s32 %s33, 1
    %s35 = scalar_select %p32, %s33, %s34
    %p38 = pneg %p32
    %p39 = scmp.eq.s32.totalorder %s11, 1
    %p40 = por %p38, %p39
    %p41 = scmp.ne.s32.totalorder %s33, %s36
    %p42 = scmp.eq.s32.totalorder %s11, 0
    %p43 = por %p41, %p42
    %p44 = scmp.ne.s32.totalorder %s33, %s36
    %p45 = scmp.eq.s32.totalorder %s16, 1
    %p46 = por %p44, %p45
    %p47 = scmp.ne.s32.totalorder %s36, %s37
    %p48 = scmp.eq.s32.totalorder %s16, 0
    %p49 = por %p47, %p48
    %p50 = scmp.ne.s32.totalorder %s36, %s37
    %p51 = scmp.eq.s32.totalorder %s17, 1
    %p52 = por %p50, %p51
    %p54 = scmp.ne.s32.totalorder %s37, %s53
    %p55 = scmp.eq.s32.totalorder %s17, 0
    %p56 = por %p54, %p55
    %s57 = ssub.s32 %s19, %s26
    %p58 = scmp.eq.s32.totalorder %s57, 0
    %s60 = sadd.s32 %s59, 1
    %s61 = scalar_select %p58, %s59, %s60
    %p64 = pneg %p58
    %p65 = scmp.eq.s32.totalorder %s11, 1
    %p66 = por %p64, %p65
    %p67 = scmp.ne.s32.totalorder %s59, %s62
    %p68 = scmp.eq.s32.totalorder %s11, 0
    %p69 = por %p67, %p68
    %p70 = scmp.ne.s32.totalorder %s59, %s62
    %p71 = scmp.eq.s32.totalorder %s16, 1
    %p72 = por %p70, %p71
    %p73 = scmp.ne.s32.totalorder %s62, %s63
    %p74 = scmp.eq.s32.totalorder %s16, 0
    %p75 = por %p73, %p74
    %p76 = scmp.ne.s32.totalorder %s62, %s63
    %p77 = scmp.eq.s32.totalorder %s17, 1
    %p78 = por %p76, %p77
    %p80 = scmp.ne.s32.totalorder %s63, %s79
    %p81 = scmp.eq.s32.totalorder %s17, 0
    %p82 = por %p80, %p81
    %s83 = ssub.s32 %s19, %s26
    %p84 = scmp.eq.s32.totalorder %s83, 0
    %s86 = sadd.s32 %s85, 1
    %s87 = scalar_select %p84, %s85, %s86
    %p90 = pneg %p84
    %p91 = scmp.eq.s32.totalorder %s11, 1
    %p92 = por %p90, %p91
    %p93 = scmp.ne.s32.totalorder %s85, %s88
    %p94 = scmp.eq.s32.totalorder %s11, 0
    %p95 = por %p93, %p94
    %p96 = scmp.ne.s32.totalorder %s85, %s88
    %p97 = scmp.eq.s32.totalorder %s16, 1
    %p98 = por %p96, %p97
    %p99 = scmp.ne.s32.totalorder %s88, %s89
    %p100 = scmp.eq.s32.totalorder %s16, 0
    %p101 = por %p99, %p100
    %p102 = scmp.ne.s32.totalorder %s88, %s89
    %p103 = scmp.eq.s32.totalorder %s17, 1
    %p104 = por %p102, %p103
    %p106 = scmp.ne.s32.totalorder %s89, %s105
    %p107 = scmp.eq.s32.totalorder %s17, 0
    %p108 = por %p106, %p107
    %s109 = ssub.s32 %s19, %s26
    %p110 = scmp.eq.s32.totalorder %s109, 0
    %s112 = sadd.s32 %s111, 1
    %s113 = scalar_select %p110, %s111, %s112
    %p116 = pneg %p110
    %p117 = scmp.eq.s32.totalorder %s11, 1
    %p118 = por %p116, %p117
    %p119 = scmp.ne.s32.totalorder %s111, %s114
    %p120 = scmp.eq.s32.totalorder %s11, 0
    %p121 = por %p119, %p120
    %p122 = scmp.ne.s32.totalorder %s111, %s114
    %p123 = scmp.eq.s32.totalorder %s16, 1
    %p124 = por %p122, %p123
    %p125 = scmp.ne.s32.totalorder %s114, %s115
    %p126 = scmp.eq.s32.totalorder %s16, 0
    %p127 = por %p125, %p126
    %p128 = scmp.ne.s32.totalorder %s114, %s115
    %p129 = scmp.eq.s32.totalorder %s17, 1
    %p130 = por %p128, %p129
    %p132 = scmp.ne.s32.totalorder %s115, %s131
    %p133 = scmp.eq.s32.totalorder %s17, 0
    %p134 = por %p132, %p133
    %s136 = sadd.s32 %s135, 1
    %p139 = scmp.eq.s32.totalorder %s11, 1
    %p140 = scmp.ne.s32.totalorder %s135, %s137
    %p141 = scmp.eq.s32.totalorder %s11, 0
    %p142 = por %p140, %p141
    %p143 = scmp.ne.s32.totalorder %s135, %s137
    %p144 = scmp.eq.s32.totalorder %s16, 1
    %p145 = por %p143, %p144
    %p146 = scmp.ne.s32.totalorder %s137, %s138
    %p147 = scmp.eq.s32.totalorder %s16, 0
    %p148 = por %p146, %p147
    %p149 = scmp.ne.s32.totalorder %s137, %s138
    %p150 = scmp.eq.s32.totalorder %s17, 1
    %p151 = por %p149, %p150
    %p153 = scmp.ne.s32.totalorder %s138, %s152
    %p154 = scmp.eq.s32.totalorder %s17, 0
    %p155 = por %p153, %p154
    %s156 = ssub.s32 %s18, %s30
    %p157 = scmp.eq.s32.totalorder %s156, 0
    %s159 = sadd.s32 %s158, 1
    %s160 = scalar_select %p157, %s158, %s159
    %p163 = pneg %p157
    %p164 = scmp.eq.s32.totalorder %s11, 1
    %p165 = por %p163, %p164
    %p166 = scmp.ne.s32.totalorder %s158, %s161
    %p167 = scmp.eq.s32.totalorder %s11, 0
    %p168 = por %p166, %p167
    %p169 = scmp.ne.s32.totalorder %s158, %s161
    %p170 = scmp.eq.s32.totalorder %s16, 1
    %p171 = por %p169, %p170
    %p172 = scmp.ne.s32.totalorder %s161, %s162
    %p173 = scmp.eq.s32.totalorder %s16, 0
    %p174 = por %p172, %p173
    %p175 = scmp.ne.s32.totalorder %s161, %s162
    %p176 = scmp.eq.s32.totalorder %s17, 1
    %p177 = por %p175, %p176
    %p179 = scmp.ne.s32.totalorder %s162, %s178
    %p180 = scmp.eq.s32.totalorder %s17, 0
    %p181 = por %p179, %p180
    %p182 = scmp.le.s32.totalorder 1, %s11
    %p183 = scmp.lt.s32.totalorder %s11, 3
    %p184 = pnand %p182, %p183
    %p185 = pneg %p184
    // Predicated region
    $region9: #{tpu_custom_call.1} parent=5 // pred_check
      _
    $region10: #{tpu_custom_call.1} parent=5 // pred_check_branch
      %187 = sbr.rel (%p184) target = $region12
    $region11: #{tpu_custom_call.1} parent=5 // pred_region
      %s188 = ssub.s32 %s11, 1
      // Predicated region
      $region13: #{tpu_custom_call.1} parent=11 // pred_check
        %p189 = pneg %p75
      $region14: #{tpu_custom_call.1} parent=11 // pred_check_branch
        %191 = sbr.rel (%p189) target = $region16
      $region15: #{tpu_custom_call.1} parent=11 // pred_region
        %p192 = scmp.lt.s32.totalorder %s21, 0
        %s193 = scalar_select %p192, %s21, 0
        %s194 = smul.addr %s193, 4
        %s195 = scalar_lea.vmem %s1, %s194
      $region16: #{tpu_custom_call.1} parent=11 // pred_fallthru
        _
      // Predicated region
      $region17: #{tpu_custom_call.1} parent=11 // pred_check
        %p196 = pneg %p101
      $region18: #{tpu_custom_call.1} parent=11 // pred_check_branch
        %198 = sbr.rel (%p196) target = $region20
      $region19: #{tpu_custom_call.1} parent=11 // pred_region
        %p199 = scmp.lt.s32.totalorder %s21, 0
        %s200 = scalar_select %p199, %s21, 0
        %s201 = scalar_lea.vmem %s2, %s200
      $region20: #{tpu_custom_call.1} parent=11 // pred_fallthru
        _
      // Predicated region
      $region21: #{tpu_custom_call.1} parent=11 // pred_check
        %p202 = pneg %p127
      $region22: #{tpu_custom_call.1} parent=11 // pred_check_branch
        %204 = sbr.rel (%p202) target = $region24
      $region23: #{tpu_custom_call.1} parent=11 // pred_region
        %s205 = smul.u32 4, %s21
        %p206 = scmp.lt.s32.totalorder %s205, 3
        %s207 = scalar_select %p206, %s205, 3
        %s208 = smul.addr %s207, 8
        %s209 = scalar_lea.vmem %s3, %s208
        %s210 = smul.u32 4, %s21
      $region24: #{tpu_custom_call.1} parent=11 // pred_fallthru
        _
      // Predicated region
      $region25: #{tpu_custom_call.1} parent=11 // pred_check
        %p211 = pneg %p148
      $region26: #{tpu_custom_call.1} parent=11 // pred_check_branch
        %213 = sbr.rel (%p211) target = $region28
      $region27: #{tpu_custom_call.1} parent=11 // pred_region
        _
      $region28: #{tpu_custom_call.1} parent=11 // pred_fallthru
        _
    $region12: #{tpu_custom_call.1} parent=5 // pred_fallthru
      _
    %p214 = scmp.lt.s32.totalorder %s11, 2
    // Predicated region
    $region29: #{tpu_custom_call.1} parent=5 // pred_check
      %p215 = pneg %p214
    $region30: #{tpu_custom_call.1} parent=5 // pred_check_branch
      %217 = sbr.rel (%p215) target = $region32
    $region31: #{tpu_custom_call.1} parent=5 // pred_region
      // Predicated region
      $region33: #{tpu_custom_call.1} parent=31 // pred_check
        %p218 = pneg %p43
      $region34: #{tpu_custom_call.1} parent=31 // pred_check_branch
        %220 = sbr.rel (%p218) target = $region36
      $region35: #{tpu_custom_call.1} parent=31 // pred_region
        %p221 = scmp.lt.s32.totalorder %s18, 1
        %s222 = scalar_select %p221, %s18, 1
        %s223 = smul.addr %s222, 8
        %s224 = scalar_lea.vmem %s0, %s223
      $region36: #{tpu_custom_call.1} parent=31 // pred_fallthru
        _
    $region32: #{tpu_custom_call.1} parent=5 // pred_fallthru
      _
    %p225 = scmp.le.s32.totalorder 1, %s11
    %p226 = scmp.lt.s32.totalorder %s11, 3
    %p227 = pnand %p225, %p226
    %p228 = pneg %p227
    // Predicated region
    $region37: #{tpu_custom_call.1} parent=5 // pred_check
      _
    $region38: #{tpu_custom_call.1} parent=5 // pred_check_branch
      %230 = sbr.rel (%p227) target = $region40
    $region39: #{tpu_custom_call.1} parent=5 // pred_region
      %s231 = ssub.s32 %s11, 1
      %p232 = scmp.lt.s32.totalorder %s20, 1
      %s233 = scalar_select %p232, %s20, 1
      %s234 = smul.addr %s233, 8
      %s235 = scalar_lea.vmem %s0, %s234
      %p236 = pneg %p49
      %p237 = pneg %p46
      %p238 = scmp.lt.s32.totalorder %s21, 0
      %s239 = scalar_select %p238, %s21, 0
      %s240 = smul.addr %s239, 4
      %s241 = scalar_lea.vmem %s1, %s240
      %p242 = pneg %p75
      %p243 = pneg %p72
      %p244 = scmp.lt.s32.totalorder %s21, 0
      %s245 = scalar_select %p244, %s21, 0
      %s246 = scalar_lea.vmem %s2, %s245
      %p247 = pneg %p101
      %p248 = pneg %p98
      %s249 = smul.u32 4, %s21
      %p250 = scmp.lt.s32.totalorder %s249, 3
      %s251 = scalar_select %p250, %s249, 3
      %s252 = smul.addr %s251, 8
      %s253 = scalar_lea.vmem %s3, %s252
      %p254 = pneg %p127
      %p255 = pneg %p124
      %p256 = pneg %p148
      %p257 = pneg %p145
      %p258 = pneg %p174
      %p259 = pneg %p171
      %p260 = scmp.lt.s32.totalorder %s20, 1
      %s261 = scalar_select %p260, %s20, 1
      %s262 = smul.addr %s261, 8
      %s263 = scalar_lea.vmem %s5, %s262
      %p264 = scmp.lt.s32.totalorder %s20, 1
      %s265 = scalar_select %p264, %s20, 1
      %s266 = smul.addr %s265, 8
      %s267 = scalar_lea.vmem %s0, %s266
      %p268 = scmp.lt.s32.totalorder %s21, 0
      %s269 = scalar_select %p268, %s21, 0
      %s270 = smul.addr %s269, 4
      %s271 = scalar_lea.vmem %s1, %s270
      %p272 = scmp.lt.s32.totalorder %s21, 0
      %s273 = scalar_select %p272, %s21, 0
      %s274 = scalar_lea.vmem %s2, %s273
      %s275 = smul.u32 4, %s21
      %p276 = scmp.lt.s32.totalorder %s275, 3
      %s277 = scalar_select %p276, %s275, 3
      %s278 = smul.addr %s277, 8
      %s279 = scalar_lea.vmem %s3, %s278
      %s280 = smul.u32 4, %s21
      %p281 = scmp.lt.s32.totalorder %s20, 1
      %s282 = scalar_select %p281, %s20, 1
      %s283 = smul.addr %s282, 8
      %s284 = scalar_lea.vmem %s5, %s283
      %p285 = scmp.eq.s32.totalorder %s21, 0
      // Predicated region
      $region41: #{tpu_custom_call.1} parent=39 // pred_check
        %p286 = pneg %p285
      $region42: #{tpu_custom_call.1} parent=39 // pred_check_branch
        %288 = sbr.rel (%p286) target = $region44
      $region43: #{tpu_custom_call.1} parent=39 // pred_region
        %vm289 = vcmask 31744
        %290 = vst.msk [vmem:[#allocation2] sm:$0xff] %vm289, 0.0
      $region44: #{tpu_custom_call.1} parent=39 // pred_fallthru
        _
      %v291 = vld [vmem:[%s267] sm:$0xff]
      %v292 = vld [vmem:[%s271] sm:$0xf]
      %v293 = vld [vmem:[%s274] sm:$0x1]
      %v295 = vlaneseq
      %v296 = vshrl.u32 %v295, 7
      %v297 = vsub.s32 0, %v296
      %v298 = vrot.slane %v293, %v297
      %vm300 = vcmask 31744
      %v302 = vsel %vm300, %v291, 0
      %vm304 = vcmask 1043456
      %v306 = vsel %vm304, %v292, 0
      %308 = vmatprep.subr.mxu0 0.0
      %309 = vmatpush1.msra.mxu0 0.0
      %310 = vmatprep.subr.mxu0 0.0
      %311 = vmatpush1.msra.mxu0 0.0
      %312 = vmatprep.subr.mxu0 0.0
      %313 = vmatpush1.msra.mxu0 0.0
      %314 = vmatprep.subr.mxu0 0.0
      %315 = vmatpush1.msra.mxu0 0.0
      %316 = vmatprep.subr.mxu0 0.0
      %317 = vmatpush1.msra.mxu0 0.0
      %318 = vmatprep.subr.mxu0 0.0
      %319 = vmatpush1.msra.mxu0 0.0
      %320 = vmatprep.subr.mxu0 0.0
      %321 = vmatpush1.msra.mxu0 0.0
      %322 = vmatprep.subr.mxu0 0.0
      %323 = vmatpush1.msra.mxu0 0.0
      %324 = vmatprep.subr.mxu0 0.0
      %325 = vmatpush1.msra.mxu0 0.0
      %326 = vmatprep.subr.mxu0 0.0
      %327 = vmatpush1.msra.mxu0 0.0
      %328 = vmatprep.subr.mxu0 0.0
      %329 = vmatpush1.msra.mxu0 0.0
      %330 = vmatprep.subr.mxu0 0.0
      %331 = vmatpush1.msra.mxu0 0.0
      %332 = vmatprep.subr.mxu0 0.0
      %333 = vmatpush1.msra.mxu0 0.0
      %334 = vmatprep.subr.mxu0 0.0
      %335 = vmatpush1.msra.mxu0 0.0
      %336 = vmatprep.subr.mxu0 0.0
      %337 = vmatpush1.msra.mxu0 0.0
      %338 = vmatprep.subr.mxu0 0.0
      %339 = vmatpush1.msra.mxu0 %v306
      %340 = vmatprep.subr.mxu0 0.0
      %341 = vmatpush2.msra.mxu0 0.0
      %342 = vmatprep.subr.mxu0 0.0
      %343 = vmatpush2.msra.mxu0 0.0
      %344 = vmatprep.subr.mxu0 0.0
      %345 = vmatpush2.msra.mxu0 0.0
      %346 = vmatprep.subr.mxu0 0.0
      %347 = vmatpush2.msra.mxu0 0.0
      %348 = vmatprep.subr.mxu0 0.0
      %349 = vmatpush2.msra.mxu0 0.0
      %350 = vmatprep.subr.mxu0 0.0
      %351 = vmatpush2.msra.mxu0 0.0
      %352 = vmatprep.subr.mxu0 0.0
      %353 = vmatpush2.msra.mxu0 0.0
      %354 = vmatprep.subr.mxu0 0.0
      %355 = vmatpush2.msra.mxu0 0.0
      %356 = vmatprep.subr.mxu0 0.0
      %357 = vmatpush2.msra.mxu0 0.0
      %358 = vmatprep.subr.mxu0 0.0
      %359 = vmatpush2.msra.mxu0 0.0
      %360 = vmatprep.subr.mxu0 0.0
      %361 = vmatpush2.msra.mxu0 0.0
      %362 = vmatprep.subr.mxu0 0.0
      %363 = vmatpush2.msra.mxu0 0.0
      %364 = vmatprep.subr.mxu0 0.0
      %365 = vmatpush2.msra.mxu0 0.0
      %366 = vmatprep.subr.mxu0 0.0
      %367 = vmatpush2.msra.mxu0 0.0
      %368 = vmatprep.subr.mxu0 0.0
      %369 = vmatpush2.msra.mxu0 0.0
      %370 = vmatprep.subr.mxu0 0.0
      %371 = vmatpush2.msra.mxu0 0.0
      %372 = vmatprep.mubr.f32.mxu0 0.0
      %373 = vmatmul.mubr.f32.gmra.mxu0 %v302
      %v374 = vpop.f32.mrf.mxu0
      %v375 = vadd.f32 %v298, %v374
      %v376 = vpop.f32.mrf.mxu0
      %377 = vdwg.mxu0
      %v378 = vmul.f32 %v375, 0.5
      %v379 = vmul.f32 %v375, 0.70710677
      %v380 = verf.f32.pop %v379
      %v381 = vadd.f32 %v380, 1.0
      %v382 = vmul.f32 %v378, %v381
      %v383 = vld [vmem:[#allocation2] sm:$0xff]
      %v384 = vld [vmem:[%s279] sm:$0xff]
      %v385 = vld [vmem:[%s279 + $0x8] sm:$0xff]
      %v386 = vld [vmem:[%s279 + $0x10] sm:$0xff]
      %v387 = vld [vmem:[%s279 + $0x18] sm:$0xff]
      %vm388 = vcmask 261120
      %v390 = vsel %vm388, %v382, 0
      %392 = vmatprep.subr.mxu0 0.0
      %393 = vmatpush1.msra.mxu0 0.0
      %394 = vmatprep.subr.mxu0 0.0
      %395 = vmatpush1.msra.mxu0 0.0
      %396 = vmatprep.subr.mxu0 0.0
      %397 = vmatpush1.msra.mxu0 0.0
      %398 = vmatprep.subr.mxu0 0.0
      %399 = vmatpush1.msra.mxu0 0.0
      %400 = vmatprep.subr.mxu0 0.0
      %401 = vmatpush1.msra.mxu0 0.0
      %402 = vmatprep.subr.mxu0 0.0
      %403 = vmatpush1.msra.mxu0 0.0
      %404 = vmatprep.subr.mxu0 0.0
      %405 = vmatpush1.msra.mxu0 0.0
      %406 = vmatprep.subr.mxu0 0.0
      %407 = vmatpush1.msra.mxu0 0.0
      %408 = vmatprep.subr.mxu0 0.0
      %409 = vmatpush1.msra.mxu0 0.0
      %410 = vmatprep.subr.mxu0 0.0
      %411 = vmatpush1.msra.mxu0 0.0
      %412 = vmatprep.subr.mxu0 0.0
      %413 = vmatpush1.msra.mxu0 0.0
      %414 = vmatprep.subr.mxu0 0.0
      %415 = vmatpush1.msra.mxu0 0.0
      %416 = vmatprep.subr.mxu0 0.0
      %417 = vmatpush1.msra.mxu0 %v387
      %418 = vmatprep.subr.mxu0 0.0
      %419 = vmatpush1.msra.mxu0 %v386
      %420 = vmatprep.subr.mxu0 0.0
      %421 = vmatpush1.msra.mxu0 %v385
      %422 = vmatprep.subr.mxu0 0.0
      %423 = vmatpush1.msra.mxu0 %v384
      %424 = vmatprep.subr.mxu0 0.0
      %425 = vmatpush2.msra.mxu0 0.0
      %426 = vmatprep.subr.mxu0 0.0
      %427 = vmatpush2.msra.mxu0 0.0
      %428 = vmatprep.subr.mxu0 0.0
      %429 = vmatpush2.msra.mxu0 0.0
      %430 = vmatprep.subr.mxu0 0.0
      %431 = vmatpush2.msra.mxu0 0.0
      %432 = vmatprep.subr.mxu0 0.0
      %433 = vmatpush2.msra.mxu0 0.0
      %434 = vmatprep.subr.mxu0 0.0
      %435 = vmatpush2.msra.mxu0 0.0
      %436 = vmatprep.subr.mxu0 0.0
      %437 = vmatpush2.msra.mxu0 0.0
      %438 = vmatprep.subr.mxu0 0.0
      %439 = vmatpush2.msra.mxu0 0.0
      %440 = vmatprep.subr.mxu0 0.0
      %441 = vmatpush2.msra.mxu0 0.0
      %442 = vmatprep.subr.mxu0 0.0
      %443 = vmatpush2.msra.mxu0 0.0
      %444 = vmatprep.subr.mxu0 0.0
      %445 = vmatpush2.msra.mxu0 0.0
      %446 = vmatprep.subr.mxu0 0.0
      %447 = vmatpush2.msra.mxu0 0.0
      %448 = vmatprep.subr.mxu0 0.0
      %449 = vmatpush2.msra.mxu0 0.0
      %450 = vmatprep.subr.mxu0 0.0
      %451 = vmatpush2.msra.mxu0 0.0
      %452 = vmatprep.subr.mxu0 0.0
      %453 = vmatpush2.msra.mxu0 0.0
      %454 = vmatprep.subr.mxu0 0.0
      %455 = vmatpush2.msra.mxu0 0.0
      %456 = vmatprep.mubr.f32.mxu0 0.0
      %457 = vmatmul.mubr.f32.gmra.mxu0 %v390
      %v458 = vpop.f32.mrf.mxu0
      %v459 = vadd.f32 0.0, %v458
      %v460 = vpop.f32.mrf.mxu0
      %461 = vdwg.mxu0
      %v462 = vadd.f32 %v383, %v459
      %463 = vst.msk [vmem:[#allocation2] sm:$0xff] %vm300, %v462
      // Predicated region
      $region45: #{tpu_custom_call.1} parent=39 // pred_check
        %p464 = pneg %p285
      $region46: #{tpu_custom_call.1} parent=39 // pred_check_branch
        %466 = sbr.rel (%p464) target = $region48
      $region47: #{tpu_custom_call.1} parent=39 // pred_region
        %v467 = vld [vmem:[#allocation2] sm:$0xff]
        %v468 = vld [vmem:[%s4] sm:$0x1]
        %v470 = vlaneseq
        %v471 = vshrl.u32 %v470, 7
        %v472 = vsub.s32 0, %v471
        %v473 = vrot.slane %v468, %v472
        %v475 = vadd.f32 %v467, %v473
        %476 = vst.msk [vmem:[%s284] sm:$0xff] %vm300, %v475
      $region48: #{tpu_custom_call.1} parent=39 // pred_fallthru
        _
      %p477 = scmp.lt.s32.totalorder %s20, 1
      %s478 = scalar_select %p477, %s20, 1
      %s479 = smul.addr %s478, 8
      %s480 = scalar_lea.vmem %s5, %s479
      // Predicated region
      $region49: #{tpu_custom_call.1} parent=39 // pred_check
        %p481 = pneg %p171
      $region50: #{tpu_custom_call.1} parent=39 // pred_check_branch
        %483 = sbr.rel (%p481) target = $region52
      $region51: #{tpu_custom_call.1} parent=39 // pred_region
        _
      $region52: #{tpu_custom_call.1} parent=39 // pred_fallthru
        _
    $region40: #{tpu_custom_call.1} parent=5 // pred_fallthru
      _
    %p484 = scmp.le.s32.totalorder 2, %s11
    // Predicated region
    $region53: #{tpu_custom_call.1} parent=5 // pred_check
      %p485 = pneg %p484
    $region54: #{tpu_custom_call.1} parent=5 // pred_check_branch
      %487 = sbr.rel (%p485) target = $region56
    $region55: #{tpu_custom_call.1} parent=5 // pred_region
      %s488 = ssub.s32 %s11, 2
      // Predicated region
      $region57: #{tpu_custom_call.1} parent=55 // pred_check
        %p489 = pneg %p177
      $region58: #{tpu_custom_call.1} parent=55 // pred_check_branch
        %491 = sbr.rel (%p489) target = $region60
      $region59: #{tpu_custom_call.1} parent=55 // pred_region
        %p492 = scmp.lt.s32.totalorder %s22, 1
        %s493 = scalar_select %p492, %s22, 1
        %s494 = smul.addr %s493, 8
        %s495 = scalar_lea.vmem %s5, %s494
      $region60: #{tpu_custom_call.1} parent=55 // pred_fallthru
        _
    $region56: #{tpu_custom_call.1} parent=5 // pred_fallthru
      _
  $region6: #{tpu_custom_call.1} parent=0 // loop_footer
    %s15 = sadd.s32 1, %s11
  $region7: #{tpu_custom_call.1} parent=0 // loop_footer_branch
    %10 = sbr.rel target = $region3
  $region8: #{tpu_custom_call.1} parent=0 // loop_exit
    _

</llo_original>
